<compile_context>
chip_gen: v7x
topology: tpu7x:2x2x1
jax: 0.10.0
libtpu: 0.0.40
codegen_flags: <defaults>
</compile_context>

<pallas_src>
import math

import jax
import jax.numpy as jnp
from jax.experimental import pallas as pl
from jax.experimental.pallas import tpu as pltpu


def _round_up(a, b):
    return ((a + b - 1) // b) * b


def _cdiv(a, b):
    return (a + b - 1) // b


def _sst_scalar_kernel(x_ref, g_ref, o_ref):
    # g_ref: (1, 1) clamped gamma scalar in SMEM (single threshold).
    g = g_ref[0, 0].astype(x_ref.dtype)
    x = x_ref[...]
    o_ref[...] = (x - jnp.minimum(jnp.maximum(x, -g), g)).astype(o_ref.dtype)


def _sst_rowwise_kernel(x_ref, g_ref, o_ref):
    # g_ref: (TM, 1) clamped per-row gamma (one row of x2 == one (n, c) plane).
    g = g_ref[...]
    x = x_ref[...]
    o_ref[...] = (x - jnp.minimum(jnp.maximum(x, -g), g)).astype(o_ref.dtype)


_BLOCK_BYTES = 4 * 1024 * 1024  # ~4 MiB x block; in+out double-buffered ~16 MiB


def _choose_tiles(rows, cols, itemsize, sub_mult, gamma_lanes):
    """Pick (tm, tn, n_row, n_col) for a (rows, cols) elementwise pass."""
    # ---- column tile ----
    max_tn = max(128, (_BLOCK_BYTES // (sub_mult * itemsize)) // 128 * 128)
    if cols <= max_tn:
        tn = cols                                   # full last dim: legal, no pad copies
        n_col = 1
    else:
        n_col = _cdiv(cols, max_tn)
        tn = _round_up(_cdiv(cols, n_col), 128)     # balanced, 128-aligned, tiny masked tail
        n_col = _cdiv(cols, tn)
    # ---- row tile (account for the lane-padded (tm,1)->(tm,128) gamma block) ----
    row_bytes = (tn + gamma_lanes) * itemsize
    tm_cap = max(sub_mult, (_BLOCK_BYTES // row_bytes) // sub_mult * sub_mult)
    if rows <= tm_cap:
        tm = rows                                   # full dim: legal, no dead rows
        n_row = 1
    else:
        n_row = _cdiv(rows, tm_cap)
        tm = _round_up(_cdiv(rows, n_row), sub_mult)  # balanced => tiny masked tail
        n_row = _cdiv(rows, tm)
    # ---- ensure >= 2 grid steps when possible (v7x has 2 TensorCores) ----
    if n_row * n_col == 1:
        if rows >= 2 * sub_mult:
            tm = _round_up(_cdiv(rows, 2), sub_mult)
            n_row = _cdiv(rows, tm)
        elif cols >= 256:
            tn = _round_up(_cdiv(cols, 2), 128)
            n_col = _cdiv(cols, tn)
    return tm, tn, n_row, n_col


def sst_forward(x, gamma):
    """SST forward: sign(x) * max(|x| - clamp(gamma, 0), 0).

    x: (N, C, H, W); gamma: (1, n_parameter, 1, 1), n_parameter in {1, C}.
    """
    N, C, H, W = x.shape
    n_param = gamma.shape[1]
    assert n_param in (1, C), "gamma must broadcast over the channel axis"

    hw = H * W
    rows = N * C
    itemsize = jnp.dtype(x.dtype).itemsize
    sub_mult = {4: 8, 2: 16, 1: 32}.get(itemsize, 8)  # sublane packing multiple

    # (N, C, H, W) -> (N*C, H*W) is a layout-preserving reshape (no HBM copy).
    x2 = x.reshape(rows, hw)

    g_clamped = jnp.maximum(gamma.reshape(n_param), 0.0)  # clamp hoisted out of the kernel

    gamma_lanes = 0 if n_param == 1 else 128
    tm, tn, n_row, n_col = _choose_tiles(rows, hw, itemsize, sub_mult, gamma_lanes)

    grid = (n_row, n_col)
    x_spec = pl.BlockSpec((tm, tn), lambda i, j: (i, j))
    out_spec = pl.BlockSpec((tm, tn), lambda i, j: (i, j))
    out_shape = jax.ShapeDtypeStruct((rows, hw), x.dtype)
    cparams = pltpu.CompilerParams(
        dimension_semantics=("parallel", "parallel"),
        vmem_limit_bytes=32 * 1024 * 1024,
    )
    cost = pl.CostEstimate(
        flops=3 * rows * hw,
        transcendentals=0,
        bytes_accessed=2 * rows * hw * itemsize,
    )

    if n_param == 1:
        # Single threshold: one SMEM scalar, no per-step gamma DMA.
        g_arg = g_clamped.reshape(1, 1).astype(jnp.float32)
        out2 = pl.pallas_call(
            _sst_scalar_kernel,
            out_shape=out_shape,
            grid=grid,
            in_specs=[
                x_spec,
                pl.BlockSpec(memory_space=pltpu.MemorySpace.SMEM),
            ],
            out_specs=out_spec,
            compiler_params=cparams,
            cost_estimate=cost,
        )(x2, g_arg)
    else:
        # Per-channel thresholds: one row of x2 is one (n, c) plane, so a tiny
        # (N*C, 1) gamma column keyed by the row-block index supplies per-row
        # thresholds (kept in x.dtype so the VPU ops stay in x's precision).
        g_rows = jnp.tile(g_clamped.astype(x.dtype), (N,)).reshape(rows, 1)
        out2 = pl.pallas_call(
            _sst_rowwise_kernel,
            out_shape=out_shape,
            grid=grid,
            in_specs=[
                x_spec,
                pl.BlockSpec((tm, 1), lambda i, j: (i, 0)),
            ],
            out_specs=out_spec,
            compiler_params=cparams,
            cost_estimate=cost,
        )(x2, g_rows)

    return out2.reshape(N, C, H, W)


def init_gamma(key, n_parameter=1):
    # nn.init.xavier_uniform_ on a (1, n_parameter, 1, 1) tensor:
    # fan_in = n_parameter * 1 * 1, fan_out = 1 * 1 * 1
    fan_in = n_parameter
    fan_out = 1
    bound = math.sqrt(6.0 / (fan_in + fan_out))
    return jax.random.uniform(
        key, (1, n_parameter, 1, 1), dtype=jnp.float32, minval=-bound, maxval=bound
    )


if __name__ == "__main__":
    key = jax.random.PRNGKey(0)
    kx, kg = jax.random.split(key)

    def ref_fn(x, gamma):
        g = jnp.maximum(gamma, 0.0)
        return jnp.sign(x) * jnp.maximum(jnp.abs(x) - g, 0.0)

    N, C, H, W = 2, 4, 16, 16
    x = jax.random.normal(kx, (N, C, H, W), dtype=jnp.float32)

    # n_parameter = 1 (module default): scalar-gamma SMEM path.
    gamma1 = init_gamma(kg, n_parameter=1)
    out1 = jax.block_until_ready(sst_forward(x, gamma1))
    assert out1.shape == x.shape
    assert jnp.allclose(out1, ref_fn(x, gamma1), atol=1e-6), "mismatch (scalar gamma)"

    # n_parameter = C: per-channel (row-wise) path, with clamped-negative,
    # zero and positive thresholds.
    gamma_c = jnp.array([-0.1, 0.0, 0.05, 0.3], jnp.float32).reshape(1, C, 1, 1)
    out_c = jax.block_until_ready(sst_forward(x, gamma_c))
    assert jnp.allclose(out_c, ref_fn(x, gamma_c), atol=1e-6), "mismatch (per-channel gamma)"

    # H*W not a multiple of 128: full-width lane-masked block, no pad copies.
    xs = jax.random.normal(kx, (2, 3, 5, 7), dtype=jnp.float32)
    gs = jnp.full((1, 1, 1, 1), 0.2, jnp.float32)
    outs = jax.block_until_ready(sst_forward(xs, gs))
    assert jnp.allclose(outs, ref_fn(xs, gs), atol=1e-6), "mismatch (narrow spatial)"

    # Column-split grid with a masked tail block (hw=324, split into 2x256).
    xm = jax.random.normal(kx, (2, 4, 18, 18), dtype=jnp.float32)
    gm = jnp.array([0.2, -0.3, 0.1, 0.0], jnp.float32).reshape(1, 4, 1, 1)
    outm = jax.block_until_ready(sst_forward(xm, gm))
    assert jnp.allclose(outm, ref_fn(xm, gm), atol=1e-6), "mismatch (masked tail)"

    print("KERNEL_OK")
</pallas_src>

<mosaic_0001>
module attributes {stable_mosaic.version = 11 : i64} {
  func.func @_sst_scalar_kernel(%arg0: i32, %arg1: i32, %arg2: memref<8x128xf32, #tpu.memory_space<vmem>>, %arg3: memref<1x1xf32, #tpu.memory_space<smem>>, %arg4: memref<8x128xf32, #tpu.memory_space<vmem>>) attributes {dimension_semantics = [#tpu.dimension_semantics<parallel>, #tpu.dimension_semantics<parallel>], iteration_bounds = array<i64: 1, 2>, scalar_prefetch = 0 : i64, scratch_operands = 0 : i64, tpu.core_type = #tpu.core_type<tc>, window_params = [{transform_indices = @transform_0, window_bounds = array<i64: 8, 128>}, {transform_indices = @transform_1, window_bounds = array<i64: 1, 1>}, {transform_indices = @transform_2, window_bounds = array<i64: 8, 128>}]} {
    %c0 = arith.constant 0 : index
    %c0_0 = arith.constant 0 : index
    %0 = memref.load %arg3[%c0, %c0_0] : memref<1x1xf32, #tpu.memory_space<smem>>
    %c0_1 = arith.constant 0 : index
    %c0_2 = arith.constant 0 : index
    %1 = vector.load %arg2[%c0_1, %c0_2] : memref<8x128xf32, #tpu.memory_space<vmem>>, vector<8x128xf32>
    %cst = arith.constant 0.000000e+00 : f32
    %2 = arith.subf %cst, %0 : f32
    %3 = vector.broadcast %2 : f32 to vector<8x128xf32>
    %4 = arith.maximumf %1, %3 : vector<8x128xf32>
    %5 = vector.broadcast %0 : f32 to vector<8x128xf32>
    %6 = arith.minimumf %4, %5 : vector<8x128xf32>
    %7 = arith.subf %1, %6 : vector<8x128xf32>
    %c0_3 = arith.constant 0 : index
    %c0_4 = arith.constant 0 : index
    %8 = vector.load %arg4[%c0_3, %c0_4] : memref<8x128xf32, #tpu.memory_space<vmem>>, vector<8x128xf32>
    tpu.vector_store %arg4[%c0_3, %c0_4], %7 {strides = array<i32>} : memref<8x128xf32, #tpu.memory_space<vmem>>, vector<8x128xf32>,
    return
  }
  func.func @transform_0(%arg0: i32, %arg1: i32) -> (i32, i32) {
    %c0_i32 = arith.constant 0 : i32
    return %arg0, %arg1 : i32, i32
  }
  func.func @transform_1(%arg0: i32, %arg1: i32) -> (i32, i32) {
    %c0_i32 = arith.constant 0 : i32
    %c0_i32_0 = arith.constant 0 : i32
    %c0_i32_1 = arith.constant 0 : i32
    return %c0_i32, %c0_i32_0 : i32, i32
  }
  func.func @transform_2(%arg0: i32, %arg1: i32) -> (i32, i32) {
    %c0_i32 = arith.constant 0 : i32
    return %arg0, %arg1 : i32, i32
  }
}

</mosaic_0001>

<llo_original>
// kernel: tpu_custom_call.1
$region0: #{tpu_custom_call.1}
  #allocation0 [shape = 'u32[]', space=smem, size = 0x4, offset = 0x4, fixed_abs, tag = 'smem constant byte address 0x4 - core index']
  #allocation1 [shape = 'u32[144,128]{1,0:T(1,128)}', space=vmem, size = 0x12000, scoped, tag = 'internal scratch']
  #allocation2 [shape = 'f32[1,1]{1,0:T(1,128)S(6)}', space=smem, size = 0x200, scoped, tag = 'scoped memory for tpu_custom_call.1']
  %s0 = inlined_call_operand.hbm [shape: f32[8,256], index: 0, kind: input, shape index: {}]
  %s1 = inlined_call_operand.<no memory space> [shape: f32[1,1], index: 1, kind: input, shape index: {}]
  %s2 = inlined_call_operand.hbm [shape: f32[8,256], index: 2, kind: output, shape index: {}]
  %s3 = sld [smem:[#allocation0]]
  $region45: #{tpu_custom_call.1} parent=0
    _
  %s5 = ssub.s32 1, %s3
  %s6 = scalar_select 0, %s5, %s3
  %7 = sst [smem:[#allocation2]] %s1
  $region1: #{tpu_custom_call.1} parent=0
    #allocation3 [shape = 'u8[8192]{0}', space=vmem, size = 0x2000, scoped, tag = 'input window, operand 0']
    #allocation4 [shape = 's32[2]{0}', space=sflag, size = 0x8, scoped, tag = 'scoped memory for tpu_custom_call.1']
    #allocation5 [shape = 's32[2]{0}', space=sflag, size = 0x8, scoped, tag = 'scoped memory for tpu_custom_call.1']
    #allocation6 [shape = 'u8[8192]{0}', space=vmem, size = 0x2000, scoped, tag = 'output window, operand 0']
    %8 = vsyncpa [#allocation4], 0
    %s9 = scalar_lea.sflag [#allocation4], 1
    %10 = vsyncpa %s9, 0
    %11 = vsyncpa [#allocation5], 0
    %s12 = scalar_lea.sflag [#allocation5], 1
    %13 = vsyncpa %s12, 0
    loop: start=0, step=1, limit=4
    $region2: #{tpu_custom_call.1} parent=1 // loop_pre_header
      _
    $region3: #{tpu_custom_call.1} parent=1 // loop_header
      %s15 = sphi 0, %s19
      %p16 = scmp.ge.s32.totalorder %s15, 4
      %s22 = sphi 0, %s34
      %s23 = sphi 0, %s30
      %s24 = sphi 0, %s22
      %s25 = sphi 0, %s23
      %s26 = sphi 0, %s24
      %s27 = sphi 0, %s25
      %s39 = sphi 0, %s41
      %s42 = sphi 0, %s39
      %s43 = sphi 0, %s42
      %s59 = sphi 0, %s43
      %s63 = sphi 0, %s63
      %s65 = sphi 0, %s63
      %s66 = sphi 0, %s65
      %s80 = sphi 0, %s66
      %s88 = sphi 0, %s90
      %s91 = sphi 0, %s88
      %s92 = sphi 0, %s91
      %s108 = sphi 0, %s92
    $region4: #{tpu_custom_call.1} parent=1 // loop_header_branch
      %18 = sbr.rel (%p16) target = $region8
    $region5: #{tpu_custom_call.1} parent=1 // loop_body
      %s20 = ssub.s32 %s15, 1
      %s21 = ssub.s32 %s15, 2
      %s28 = sadd.s32 1, %s23
      %p29 = scmp.ge.s32.totalorder %s28, 2
      %s30 = scalar_select %p29, 0, %s28
      %s31 = sadd.s32 1, %s22
      %s32 = scalar_select %p29, %s31, %s22
      %p33 = scmp.ge.s32.totalorder %s32, 1
      %s34 = scalar_select %p33, 0, %s32
      %s35 = ssub.s32 %s22, %s34
      %s36 = ssub.s32 %s23, %s30
      %s37 = sor.u32 %s35, %s36
      %p38 = scmp.eq.s32.totalorder %s37, 0
      %s40 = sadd.s32 %s39, 1
      %s41 = scalar_select %p38, %s39, %s40
      %p44 = pneg %p38
      %p45 = scmp.eq.s32.totalorder %s15, 1
      %p46 = por %p44, %p45
      %p47 = scmp.ne.s32.totalorder %s39, %s42
      %p48 = scmp.eq.s32.totalorder %s15, 0
      %p49 = por %p47, %p48
      %p50 = scmp.ne.s32.totalorder %s39, %s42
      %p51 = scmp.eq.s32.totalorder %s20, 1
      %p52 = por %p50, %p51
      %p53 = scmp.ne.s32.totalorder %s42, %s43
      %p54 = scmp.eq.s32.totalorder %s20, 0
      %p55 = por %p53, %p54
      %p56 = scmp.ne.s32.totalorder %s42, %s43
      %p57 = scmp.eq.s32.totalorder %s21, 1
      %p58 = por %p56, %p57
      %p60 = scmp.ne.s32.totalorder %s43, %s59
      %p61 = scmp.eq.s32.totalorder %s21, 0
      %p62 = por %p60, %p61
      %s64 = sadd.s32 %s63, 1
      %p67 = scmp.eq.s32.totalorder %s15, 1
      %p68 = scmp.ne.s32.totalorder %s63, %s65
      %p69 = scmp.eq.s32.totalorder %s15, 0
      %p70 = por %p68, %p69
      %p71 = scmp.ne.s32.totalorder %s63, %s65
      %p72 = scmp.eq.s32.totalorder %s20, 1
      %p73 = por %p71, %p72
      %p74 = scmp.ne.s32.totalorder %s65, %s66
      %p75 = scmp.eq.s32.totalorder %s20, 0
      %p76 = por %p74, %p75
      %p77 = scmp.ne.s32.totalorder %s65, %s66
      %p78 = scmp.eq.s32.totalorder %s21, 1
      %p79 = por %p77, %p78
      %p81 = scmp.ne.s32.totalorder %s66, %s80
      %p82 = scmp.eq.s32.totalorder %s21, 0
      %p83 = por %p81, %p82
      %s84 = ssub.s32 %s22, %s34
      %s85 = ssub.s32 %s23, %s30
      %s86 = sor.u32 %s84, %s85
      %p87 = scmp.eq.s32.totalorder %s86, 0
      %s89 = sadd.s32 %s88, 1
      %s90 = scalar_select %p87, %s88, %s89
      %p93 = pneg %p87
      %p94 = scmp.eq.s32.totalorder %s15, 1
      %p95 = por %p93, %p94
      %p96 = scmp.ne.s32.totalorder %s88, %s91
      %p97 = scmp.eq.s32.totalorder %s15, 0
      %p98 = por %p96, %p97
      %p99 = scmp.ne.s32.totalorder %s88, %s91
      %p100 = scmp.eq.s32.totalorder %s20, 1
      %p101 = por %p99, %p100
      %p102 = scmp.ne.s32.totalorder %s91, %s92
      %p103 = scmp.eq.s32.totalorder %s20, 0
      %p104 = por %p102, %p103
      %p105 = scmp.ne.s32.totalorder %s91, %s92
      %p106 = scmp.eq.s32.totalorder %s21, 1
      %p107 = por %p105, %p106
      %p109 = scmp.ne.s32.totalorder %s92, %s108
      %p110 = scmp.eq.s32.totalorder %s21, 0
      %p111 = por %p109, %p110
      %p112 = scmp.le.s32.totalorder 1, %s15
      %p113 = scmp.lt.s32.totalorder %s15, 3
      %p114 = pnand %p112, %p113
      %p115 = pneg %p114
      // Predicated region
      $region9: #{tpu_custom_call.1} parent=5 // pred_check
        _
      $region10: #{tpu_custom_call.1} parent=5 // pred_check_branch
        %117 = sbr.rel (%p114) target = $region12
      $region11: #{tpu_custom_call.1} parent=5 // pred_region
        %s118 = ssub.s32 %s15, 1
        // Predicated region
        $region13: #{tpu_custom_call.1} parent=11 // pred_check
          %p119 = pneg %p76
        $region14: #{tpu_custom_call.1} parent=11 // pred_check_branch
          %121 = sbr.rel (%p119) target = $region16
        $region15: #{tpu_custom_call.1} parent=11 // pred_region
          _
        $region16: #{tpu_custom_call.1} parent=11 // pred_fallthru
          _
      $region12: #{tpu_custom_call.1} parent=5 // pred_fallthru
        _
      %p122 = scmp.lt.s32.totalorder %s15, 2
      // Predicated region
      $region17: #{tpu_custom_call.1} parent=5 // pred_check
        %p123 = pneg %p122
      $region18: #{tpu_custom_call.1} parent=5 // pred_check_branch
        %125 = sbr.rel (%p123) target = $region20
      $region19: #{tpu_custom_call.1} parent=5 // pred_region
        // Predicated region
        $region21: #{tpu_custom_call.1} parent=19 // pred_check
          %p126 = pneg %p49
        $region22: #{tpu_custom_call.1} parent=19 // pred_check_branch
          %128 = sbr.rel (%p126) target = $region24
        $region23: #{tpu_custom_call.1} parent=19 // pred_region
          %s129 = sand.u32 %s39, 1
          %s130 = scalar_lea.sflag [#allocation4], %s129
          %s131 = sand.u32 %s39, 1
          %s132 = smul.addr %s131, 8
          %s133 = scalar_lea.vmem [#allocation3], %s132
          %s135 = ssub.s32 128, 128
          %136 = vsyncadd %s130, %s135
          %s137 = smul.addr %s22, 2
          %s138 = sadd.s32 %s23, %s137
          %s139 = smul.addr %s138, 128
          %s140 = scalar_lea.hbm %s0, %s139
          %s142 = sshll.u32 %s133, 4
          %s143 = int_to_ptr.vmem [resolvable:$true] %s142
          %145 = dma.hbm_to_vmem [thread:$0]  %s140, 128, %s143, %s130
        $region24: #{tpu_custom_call.1} parent=19 // pred_fallthru
          _
      $region20: #{tpu_custom_call.1} parent=5 // pred_fallthru
        _
      %p146 = scmp.le.s32.totalorder 1, %s15
      %p147 = scmp.lt.s32.totalorder %s15, 3
      %p148 = pnand %p146, %p147
      %p149 = pneg %p148
      // Predicated region
      $region25: #{tpu_custom_call.1} parent=5 // pred_check
        _
      $region26: #{tpu_custom_call.1} parent=5 // pred_check_branch
        %151 = sbr.rel (%p148) target = $region28
      $region27: #{tpu_custom_call.1} parent=5 // pred_region
        %s152 = ssub.s32 %s15, 1
        %s153 = sand.u32 %s42, 1
        %s154 = scalar_lea.sflag [#allocation4], %s153
        %s155 = sand.u32 %s42, 1
        %s156 = smul.addr %s155, 8
        %s157 = scalar_lea.vmem [#allocation3], %s156
        // Predicated region
        $region29: #{tpu_custom_call.1} parent=27 // pred_check
          %p158 = pneg %p55
        $region30: #{tpu_custom_call.1} parent=27 // pred_check_branch
          %160 = sbr.rel (%p158) target = $region32
        $region31: #{tpu_custom_call.1} parent=27 // pred_region
          %161 = dma.done %s154, 128
        $region32: #{tpu_custom_call.1} parent=27 // pred_fallthru
          _
        %s162 = sand.u32 %s42, 1
        %s163 = scalar_lea.sflag [#allocation4], %s162
        %s164 = sand.u32 %s42, 1
        %s165 = smul.addr %s164, 8
        %s166 = scalar_lea.vmem [#allocation3], %s165
        %p167 = pneg %p55
        %p168 = pneg %p52
        %p169 = pneg %p76
        %p170 = pneg %p73
        %p171 = pneg %p104
        %p172 = pneg %p101
        %s173 = sand.u32 %s91, 1
        %s174 = scalar_lea.sflag [#allocation5], %s173
        %s175 = sand.u32 %s91, 1
        %s176 = smul.addr %s175, 8
        %s177 = scalar_lea.vmem [#allocation6], %s176
        %s178 = sld [smem:[#allocation2]]
        %v179 = vld [vmem:[%s157] sm:$0xff]
        %s180 = ssub.f32 0.0, %s178
        %v181 = vstv %s180
        %v182 = vmax.f32 %v179, %v181
        %v183 = vstv %s178
        %v184 = vmin.f32 %v182, %v183
        %v185 = vsub.f32 %v179, %v184
        %186 = vst [vmem:[%s177] sm:$0xff] %v185
        %s187 = sand.u32 %s91, 1
        %s188 = scalar_lea.sflag [#allocation5], %s187
        %s189 = sand.u32 %s91, 1
        %s190 = smul.addr %s189, 8
        %s191 = scalar_lea.vmem [#allocation6], %s190
        // Predicated region
        $region33: #{tpu_custom_call.1} parent=27 // pred_check
          %p192 = pneg %p101
        $region34: #{tpu_custom_call.1} parent=27 // pred_check_branch
          %194 = sbr.rel (%p192) target = $region36
        $region35: #{tpu_custom_call.1} parent=27 // pred_region
          %s196 = ssub.s32 128, 128
          %197 = vsyncadd %s188, %s196
          %s198 = smul.addr %s24, 2
          %s199 = sadd.s32 %s25, %s198
          %s200 = smul.addr %s199, 128
          %s201 = scalar_lea.hbm %s2, %s200
          %s203 = sshll.u32 %s191, 4
          %s204 = int_to_ptr.vmem [resolvable:$true] %s203
          %206 = dma.vmem_to_hbm [thread:$0]  %s204, 128, %s201, %s188
        $region36: #{tpu_custom_call.1} parent=27 // pred_fallthru
          _
      $region28: #{tpu_custom_call.1} parent=5 // pred_fallthru
        _
      %p207 = scmp.le.s32.totalorder 2, %s15
      // Predicated region
      $region37: #{tpu_custom_call.1} parent=5 // pred_check
        %p208 = pneg %p207
      $region38: #{tpu_custom_call.1} parent=5 // pred_check_branch
        %210 = sbr.rel (%p208) target = $region40
      $region39: #{tpu_custom_call.1} parent=5 // pred_region
        %s211 = ssub.s32 %s15, 2
        // Predicated region
        $region41: #{tpu_custom_call.1} parent=39 // pred_check
          %p212 = pneg %p107
        $region42: #{tpu_custom_call.1} parent=39 // pred_check_branch
          %214 = sbr.rel (%p212) target = $region44
        $region43: #{tpu_custom_call.1} parent=39 // pred_region
          %s215 = sand.u32 %s92, 1
          %s216 = scalar_lea.sflag [#allocation5], %s215
          %s217 = sand.u32 %s92, 1
          %s218 = smul.addr %s217, 8
          %s219 = scalar_lea.vmem [#allocation6], %s218
          %220 = dma.done %s216, 128
        $region44: #{tpu_custom_call.1} parent=39 // pred_fallthru
          _
      $region40: #{tpu_custom_call.1} parent=5 // pred_fallthru
        _
    $region6: #{tpu_custom_call.1} parent=1 // loop_footer
      %s19 = sadd.s32 1, %s15
    $region7: #{tpu_custom_call.1} parent=1 // loop_footer_branch
      %14 = sbr.rel target = $region3
    $region8: #{tpu_custom_call.1} parent=1 // loop_exit
      _
    %221 = vsyncpa [#allocation4], 1
    %s222 = scalar_lea.sflag [#allocation4], 1
    %223 = vsyncpa %s222, 1
    %224 = vsyncpa [#allocation5], 1
    %s225 = scalar_lea.sflag [#allocation5], 1
    %226 = vsyncpa %s225, 1

</llo_original>
